<compile_context>
chip_gen: v7x
topology: tpu7x:2x2x1
jax: 0.10.0
libtpu: 0.0.40
codegen_flags: <defaults>
</compile_context>

<pallas_src>
import jax
import jax.numpy as jnp
from jax.experimental import pallas as pl
from jax.experimental.pallas import tpu as pltpu


def _diver_kernel(x_ref, o_ref):
    # x / 1.0 + 0.0  ==  x + 0.0  (exact; keeps the -0.0 -> +0.0 behaviour of
    # the PyTorch reference).  The add is free in the HBM-bound regime.
    o_ref[...] = x_ref[...] + 0.0


def _choose_2d_shape(total):
    """Pick a lane-dense (rows, lane_width) view of the flattened array.

    Wider lane widths are preferred: the output last dim being a large
    multiple of 128 gives unmasked vector stores.
    """
    for lw in (2048, 1024, 512, 256, 128):
        if total % lw == 0:
            return total // lw, lw
    return None


def diver_forward(x: jax.Array) -> jax.Array:
    """Pallas equivalent of Diver.forward (elementwise pass-through)."""
    orig_shape = x.shape
    if x.size == 0:
        return x

    total = int(x.size)
    itemsize = jnp.dtype(x.dtype).itemsize
    shape2d = _choose_2d_shape(total)

    if shape2d is None:
        # Awkward element count (not a multiple of 128): run a single
        # full-array block.  Block shape == full array dims is always legal,
        # and such shapes are small edge cases in practice.
        x2d = x.reshape((1, total))
        out2d = pl.pallas_call(
            _diver_kernel,
            out_shape=jax.ShapeDtypeStruct((1, total), x.dtype),
        )(x2d)
        return out2d.reshape(orig_shape)

    rows, lane_w = shape2d
    x2d = x.reshape((rows, lane_w))  # contiguous flatten: metadata-only.

    # Target ~2 MiB per tile; keep sublane (8) alignment on the row dim.
    target_rows = max(8, (2 << 20) // max(1, lane_w * itemsize))
    target_rows = (target_rows // 8) * 8
    tile_rows = rows if rows <= target_rows else target_rows

    grid = (pl.cdiv(rows, tile_rows),)

    out2d = pl.pallas_call(
        _diver_kernel,
        out_shape=jax.ShapeDtypeStruct((rows, lane_w), x.dtype),
        grid=grid,
        in_specs=[pl.BlockSpec((tile_rows, lane_w), lambda i: (i, 0))],
        out_specs=pl.BlockSpec((tile_rows, lane_w), lambda i: (i, 0)),
        compiler_params=pltpu.CompilerParams(
            dimension_semantics=("parallel",)),
    )(x2d)

    return out2d.reshape(orig_shape)


if __name__ == "__main__":
    key = jax.random.PRNGKey(0)

    # Small NCHW input consistent with the module's conv-style convention.
    x = jax.random.normal(key, (2, 4, 16, 16), dtype=jnp.float32)
    y = diver_forward(x)
    jax.block_until_ready(y)
    assert y.shape == x.shape and y.dtype == x.dtype
    assert jnp.allclose(y, x / 1.0 + 0.0)

    # A larger input to exercise the tiled / pipelined path.
    x_big = jax.random.normal(jax.random.PRNGKey(1), (4, 8, 128, 128),
                              dtype=jnp.float32)
    y_big = diver_forward(x_big)
    jax.block_until_ready(y_big)
    assert jnp.allclose(y_big, x_big / 1.0 + 0.0)

    # A bf16 input with an awkward row count (not a multiple of the 2 MiB
    # tile) to exercise the partial-last-block path.
    x_bf16 = jax.random.normal(jax.random.PRNGKey(2), (3, 5, 8, 128),
                               dtype=jnp.bfloat16)
    y_bf16 = diver_forward(x_bf16)
    jax.block_until_ready(y_bf16)
    assert y_bf16.dtype == jnp.bfloat16
    assert jnp.array_equal(y_bf16, x_bf16 / 1.0 + 0.0)

    print("KERNEL_OK")
</pallas_src>

<mosaic_0001>
module attributes {stable_mosaic.version = 11 : i64} {
  func.func @_diver_kernel(%arg0: i32, %arg1: memref<1x2048xf32, #tpu.memory_space<vmem>>, %arg2: memref<1x2048xf32, #tpu.memory_space<vmem>>) attributes {dimension_semantics = [#tpu.dimension_semantics<parallel>], iteration_bounds = array<i64: 1>, scalar_prefetch = 0 : i64, scratch_operands = 0 : i64, tpu.core_type = #tpu.core_type<tc>, window_params = [{transform_indices = @transform_0, window_bounds = array<i64: 1, 2048>}, {transform_indices = @transform_1, window_bounds = array<i64: 1, 2048>}]} {
    %c0 = arith.constant 0 : index
    %c0_0 = arith.constant 0 : index
    %0 = vector.load %arg1[%c0, %c0_0] : memref<1x2048xf32, #tpu.memory_space<vmem>>, vector<1x2048xf32>
    %cst = arith.constant 0.000000e+00 : f32
    %1 = vector.broadcast %cst : f32 to vector<1x2048xf32>
    %2 = arith.addf %0, %1 : vector<1x2048xf32>
    %c0_1 = arith.constant 0 : index
    %c0_2 = arith.constant 0 : index
    %3 = vector.load %arg2[%c0_1, %c0_2] : memref<1x2048xf32, #tpu.memory_space<vmem>>, vector<1x2048xf32>
    tpu.vector_store %arg2[%c0_1, %c0_2], %2 {strides = array<i32>} : memref<1x2048xf32, #tpu.memory_space<vmem>>, vector<1x2048xf32>,
    return
  }
  func.func @transform_0(%arg0: i32) -> (i32, i32) {
    %c0_i32 = arith.constant 0 : i32
    %c0_i32_0 = arith.constant 0 : i32
    return %arg0, %c0_i32 : i32, i32
  }
  func.func @transform_1(%arg0: i32) -> (i32, i32) {
    %c0_i32 = arith.constant 0 : i32
    %c0_i32_0 = arith.constant 0 : i32
    return %arg0, %c0_i32 : i32, i32
  }
}

</mosaic_0001>

<llo_original>
// kernel: tpu_custom_call.1
$region0: #{tpu_custom_call.1}
  #allocation0 [shape = 'u32[]', space=smem, size = 0x4, offset = 0x4, fixed_abs, tag = 'smem constant byte address 0x4 - core index']
  #allocation1 [shape = 'u32[144,128]{1,0:T(1,128)}', space=vmem, size = 0x12000, scoped, tag = 'internal scratch']
  %s0 = inlined_call_operand.hbm [shape: f32[1,2048], index: 0, kind: input, shape index: {}]
  %s1 = inlined_call_operand.hbm [shape: f32[1,2048], index: 1, kind: output, shape index: {}]
  %s2 = sld [smem:[#allocation0]]
  $region18: #{tpu_custom_call.1} parent=0
    _
  %s4 = ssub.s32 1, %s2
  %s5 = scalar_select 0, %s4, %s2
  $region1: #{tpu_custom_call.1} parent=0
    #allocation2 [shape = 'u8[8192]{0}', space=vmem, size = 0x2000, scoped, tag = 'input window, operand 0, single buffered']
    #allocation3 [shape = 's32[1]{0}', space=sflag, size = 0x4, scoped, tag = 'scoped memory for tpu_custom_call.1']
    #allocation4 [shape = 's32[1]{0}', space=sflag, size = 0x4, scoped, tag = 'scoped memory for tpu_custom_call.1']
    #allocation5 [shape = 'u8[8192]{0}', space=vmem, size = 0x2000, scoped, tag = 'output window, operand 0, single buffered']
    %6 = vsyncpa [#allocation3], 0
    %7 = vsyncpa [#allocation4], 0
    // Predicated region
    $region2: #{tpu_custom_call.1} parent=1 // pred_check
      _
    $region3: #{tpu_custom_call.1} parent=1 // pred_check_branch
      %9 = sbr.rel (0) target = $region5
    $region4: #{tpu_custom_call.1} parent=1 // pred_region
      %s11 = ssub.s32 256, 256
      %12 = vsyncadd [#allocation3], %s11
      %s14 = sshll.u32 [#allocation2], 4
      %s15 = int_to_ptr.vmem [resolvable:$true] %s14
      %17 = dma.hbm_to_vmem [thread:$0]  %s0, 256, %s15, [#allocation3]
    $region5: #{tpu_custom_call.1} parent=1 // pred_fallthru
      _
    // Predicated region
    $region6: #{tpu_custom_call.1} parent=1 // pred_check
      _
    $region7: #{tpu_custom_call.1} parent=1 // pred_check_branch
      %19 = sbr.rel (0) target = $region9
    $region8: #{tpu_custom_call.1} parent=1 // pred_region
      %20 = dma.done [#allocation3], 256
    $region9: #{tpu_custom_call.1} parent=1 // pred_fallthru
      _
    %v21 = vld [vmem:[#allocation2] sm:$0xff]
    %v22 = vld [vmem:[#allocation2 + $0x8] sm:$0xff]
    %v23 = vadd.f32 %v21, 0.0
    %v24 = vadd.f32 %v22, 0.0
    %25 = vst [vmem:[#allocation5] sm:$0xff] %v23
    %26 = vst [vmem:[#allocation5 + $0x8] sm:$0xff] %v24
    // Predicated region
    $region10: #{tpu_custom_call.1} parent=1 // pred_check
      _
    $region11: #{tpu_custom_call.1} parent=1 // pred_check_branch
      %28 = sbr.rel (0) target = $region13
    $region12: #{tpu_custom_call.1} parent=1 // pred_region
      %s30 = ssub.s32 256, 256
      %31 = vsyncadd [#allocation4], %s30
      %s33 = sshll.u32 [#allocation5], 4
      %s34 = int_to_ptr.vmem [resolvable:$true] %s33
      %36 = dma.vmem_to_hbm [thread:$0]  %s34, 256, %s1, [#allocation4]
    $region13: #{tpu_custom_call.1} parent=1 // pred_fallthru
      _
    // Predicated region
    $region14: #{tpu_custom_call.1} parent=1 // pred_check
      _
    $region15: #{tpu_custom_call.1} parent=1 // pred_check_branch
      %38 = sbr.rel (0) target = $region17
    $region16: #{tpu_custom_call.1} parent=1 // pred_region
      %39 = dma.done [#allocation4], 256
    $region17: #{tpu_custom_call.1} parent=1 // pred_fallthru
      _
    %40 = vsyncpa [#allocation3], 1
    %41 = vsyncpa [#allocation4], 1

</llo_original>
